<compile_context>
chip_gen: v7x
topology: tpu7x:2x2x1
jax: 0.10.0
libtpu: 0.0.40
codegen_flags: <defaults>
</compile_context>

<pallas_src>
import numpy as np

import jax
import jax.numpy as jnp
from jax import lax
from jax.experimental import pallas as pl
from jax.experimental.pallas import tpu as pltpu

_PAD_NODE_ID = 2 ** 30  # sentinel for padded entries; never matches a real lane


def _round_up(x, m):
    return ((x + m - 1) // m) * m


def _precond_timing_kernel(tile_r, block_r, code_r, ids_ref, w_ref, o_ref):
    """Grid = (split i [parallel], step k [arbitrary]).

    tile_r:  (S,) int32 SMEM   step -> output node tile
    block_r: (S,) int32 SMEM   step -> entry block (used by index maps only)
    code_r:  (S,) int32 SMEM   step -> 0 pad / 1 accumulate / 2 init+accumulate
    ids_ref: (TB, 1) int32 VMEM  sorted entry node ids
    w_ref:   (TB, 1) f32   VMEM  sorted entry weights (unscaled)
    o_ref:   (1, TN) f32   VMEM  resident accumulator tile
    """
    del block_r  # only consumed by the index maps
    s = pl.program_id(0) * pl.num_programs(1) + pl.program_id(1)
    code = code_r[s]
    tn = o_ref.shape[1]

    @pl.when(code == 2)
    def _init():
        o_ref[...] = jnp.zeros_like(o_ref)

    @pl.when(code >= 1)
    def _accum():
        node_ids = tile_r[s] * tn + lax.broadcasted_iota(jnp.int32, (1, tn), 1)
        # Fused VPU compare/select; entry (sublane) reduction into the output
        # tile. No hit matrix in VMEM, MXU stays idle, f32 throughout.
        contrib = jnp.where(ids_ref[...] == node_ids, w_ref[...], 0.0)  # (TB,TN)
        o_ref[...] += jnp.sum(contrib, axis=0, keepdims=True)


class PrecondTimingPallas:
    """Pallas/TPU replacement for DREAMPlaceFPGA's PrecondTiming module.

    Structure-only preprocessing (entry sort, per-tile entry windows, the
    flattened step schedule) runs once here, like the module's __init__;
    forward is a single jit-compiled gather + pallas_call.
    """

    def __init__(self, flat_tnet2pin, pin2node_map, num_nodes,
                 *, node_tile=256, entry_tile=512, num_splits=2):
        assert node_tile % 128 == 0, "node_tile must be a multiple of 128"
        assert entry_tile % 8 == 0, "entry_tile must be a multiple of 8"
        assert num_nodes < 2 ** 30, "pad sentinel assumes num_nodes < 2**30"

        self.num_nodes = int(num_nodes)

        f2p = np.asarray(flat_tnet2pin, dtype=np.int64)
        p2n = np.asarray(pin2node_map, dtype=np.int64)
        node_a = p2n[f2p[0::2]]
        node_b = p2n[f2p[1::2]]
        entry_nodes = np.concatenate([node_a, node_b])        # (E,), E = 2*T
        num_entries = int(entry_nodes.shape[0])
        self.num_entries = num_entries
        self.num_tnets = num_entries // 2

        if num_entries == 0 or self.num_nodes == 0:
            self._fwd = None
            return

        order = np.argsort(entry_nodes, kind="stable")
        sorted_nodes = entry_nodes[order]

        # ---- Tiling (lane-dense node tiles, sublane-major entry chunks) ----
        tn = min(node_tile, _round_up(self.num_nodes, 128))
        n_padded = _round_up(self.num_nodes, tn)
        n_tiles = n_padded // tn

        tb = min(entry_tile, _round_up(num_entries, 8))
        e_padded = _round_up(num_entries, tb)
        total_blocks = e_padded // tb

        # ---- Per-tile relevant entry-block window (from the sort) ----
        tile_starts = np.arange(n_tiles, dtype=np.int64) * tn
        lo = np.searchsorted(sorted_nodes, tile_starts, side="left")
        hi = np.searchsorted(sorted_nodes, tile_starts + tn, side="left")
        lo_blk = np.minimum(lo // tb, total_blocks - 1)
        hi_blk = np.clip((hi + tb - 1) // tb, lo_blk + 1, total_blocks)
        blocks_per_tile = hi_blk - lo_blk                     # >= 1 each (init)

        # ---- Flattened schedule: exactly sum(blocks_per_tile) real steps ----
        csum = np.concatenate([[0], np.cumsum(blocks_per_tile)]).astype(np.int64)
        total_steps = int(csum[-1])
        step_tiles = np.repeat(np.arange(n_tiles, dtype=np.int64), blocks_per_tile)
        within = np.arange(total_steps, dtype=np.int64) - csum[step_tiles]
        step_blocks = lo_blk[step_tiles] + within
        step_codes = np.where(within == 0, 2, 1).astype(np.int64)

        # ---- Split tiles into contiguous, chunk-balanced groups so the
        #      leading "parallel" axis load-balances v7x's two cores ----
        num_splits = int(max(1, min(num_splits, n_tiles)))
        cut = [0]
        for si in range(1, num_splits):
            target = si * total_steps / num_splits
            t = int(np.searchsorted(csum, target, side="left"))
            t = min(max(t, cut[-1] + 1), n_tiles - (num_splits - si))
            cut.append(t)
        cut.append(n_tiles)
        bounds = [int(csum[t]) for t in cut]
        spp = max(bounds[s + 1] - bounds[s] for s in range(num_splits))

        tile_arr = np.zeros((num_splits, spp), np.int32)
        block_arr = np.zeros((num_splits, spp), np.int32)
        code_arr = np.zeros((num_splits, spp), np.int32)      # 0 = padded no-op
        for s in range(num_splits):
            a, b = bounds[s], bounds[s + 1]
            n = b - a
            tile_arr[s, :n] = step_tiles[a:b]
            block_arr[s, :n] = step_blocks[a:b]
            code_arr[s, :n] = step_codes[a:b]
            # Pad steps revisit the split's last (tile, block): no new DMA,
            # compute skipped, and the rewritten-back tile already holds its
            # final correct contents.
            tile_arr[s, n:] = step_tiles[b - 1]
            block_arr[s, n:] = step_blocks[b - 1]

        tile_1d = jnp.asarray(tile_arr.reshape(-1))
        block_1d = jnp.asarray(block_arr.reshape(-1))
        code_1d = jnp.asarray(code_arr.reshape(-1))

        # ---- Sorted, padded entry node ids (structure constants) ----
        pad = e_padded - num_entries
        ids = np.concatenate(
            [sorted_nodes, np.full((pad,), _PAD_NODE_ID, dtype=np.int64)])
        ids2 = jnp.asarray(ids.reshape(e_padded, 1), jnp.int32)
        order_j = jnp.asarray(order, jnp.int32)

        # ---- pallas_call (shapes static; built once) ----
        def entry_map(i, k, tile_r, block_r, code_r):
            return (block_r[i * spp + k], 0)

        def out_map(i, k, tile_r, block_r, code_r):
            return (0, tile_r[i * spp + k])

        grid_spec = pltpu.PrefetchScalarGridSpec(
            num_scalar_prefetch=3,
            grid=(num_splits, spp),
            in_specs=[
                pl.BlockSpec((tb, 1), entry_map),   # entry node ids
                pl.BlockSpec((tb, 1), entry_map),   # entry weights
            ],
            out_specs=pl.BlockSpec((1, tn), out_map),
        )

        call = pl.pallas_call(
            _precond_timing_kernel,
            out_shape=jax.ShapeDtypeStruct((1, n_padded), jnp.float32),
            grid_spec=grid_spec,
            compiler_params=pltpu.CompilerParams(
                dimension_semantics=("parallel", "arbitrary")),
        )

        num_nodes_ = self.num_nodes

        def fwd(beta, tnet_weights):
            tw = tnet_weights.astype(jnp.float32)
            # Gather weights into sorted-entry order (single fused pass).
            w = jnp.take(jnp.concatenate([tw, tw]), order_j)
            if pad:
                w = jnp.concatenate([w, jnp.zeros((pad,), jnp.float32)])
            out = call(tile_1d, block_1d, code_1d, ids2, w.reshape(e_padded, 1))
            # `out * beta` on the N-length result, exactly as in the original
            # module; fused with the slice under jit (no extra E-length pass).
            return out[0, :num_nodes_] * beta.astype(jnp.float32)

        self._fwd = jax.jit(fwd)

    def __call__(self, beta, tnet_weights):
        if self._fwd is None:
            return jnp.zeros((self.num_nodes,), jnp.float32)
        return self._fwd(jnp.asarray(beta, jnp.float32),
                         jnp.asarray(tnet_weights, jnp.float32))


def _reference(beta, tnet_weights, flat_tnet2pin, pin2node_map, num_nodes):
    node_a = pin2node_map[flat_tnet2pin[0::2]]
    node_b = pin2node_map[flat_tnet2pin[1::2]]
    out = jnp.zeros((num_nodes,), jnp.float32)
    out = out.at[node_a].add(tnet_weights)
    out = out.at[node_b].add(tnet_weights)
    return out * beta


if __name__ == "__main__":
    # Deterministic synthetic problem: multiple node tiles, multiple entry
    # chunks per tile, padding on both axes, and two parallel splits.
    num_tnets = 3000          # not a multiple of the chunk size
    num_pins = 4096
    num_nodes = 2500          # not a multiple of 128
    num_movable_nodes = 1000  # unused in forward math, kept for fidelity

    key = jax.random.PRNGKey(0)
    k1, k2, k3 = jax.random.split(key, 3)

    flat_tnet2pin = jax.random.randint(
        k1, (2 * num_tnets,), 0, num_pins, dtype=jnp.int32)
    pin2node_map = jax.random.randint(
        k2, (num_pins,), 0, num_nodes, dtype=jnp.int32)
    tnet_weights = jax.random.uniform(k3, (num_tnets,), jnp.float32)
    beta = 0.75

    op = PrecondTimingPallas(flat_tnet2pin, pin2node_map, num_nodes)
    out = jax.block_until_ready(op(beta, tnet_weights))

    ref = _reference(beta, tnet_weights, flat_tnet2pin, pin2node_map, num_nodes)
    assert out.shape == (num_nodes,)
    assert jnp.allclose(out, ref, atol=1e-4, rtol=1e-4), "mismatch vs reference"

    print("KERNEL_OK")
</pallas_src>

<mosaic_0001>
module attributes {stable_mosaic.version = 11 : i64} {
  func.func private @main(%arg0: i32) attributes {dimension_semantics = [#tpu.dimension_semantics<core_parallel>], iteration_bounds = array<i64: 2>, tpu.core_type = #tpu.core_type<sc_scalar_subcore>, window_params = []} {
    return
  }
}

module attributes {stable_mosaic.version = 11 : i64} {
  func.func private @main(%arg0: i32) attributes {dimension_semantics = [#tpu.dimension_semantics<core_parallel>], iteration_bounds = array<i64: 2>, tpu.core_type = #tpu.core_type<sc_scalar_subcore>, window_params = []} {
    return
  }
}

module attributes {stable_mosaic.version = 11 : i64} {
  func.func @_precond_timing_kernel(%arg0: i32, %arg1: i32, %arg2: memref<22xi32, #tpu.memory_space<smem>>, %arg3: memref<22xi32, #tpu.memory_space<smem>>, %arg4: memref<22xi32, #tpu.memory_space<smem>>, %arg5: memref<512x1xi32, #tpu.memory_space<vmem>>, %arg6: memref<512x1xf32, #tpu.memory_space<vmem>>, %arg7: memref<1x256xf32, #tpu.memory_space<vmem>>) attributes {dimension_semantics = [#tpu.dimension_semantics<parallel>, #tpu.dimension_semantics<arbitrary>], iteration_bounds = array<i64: 2, 11>, scalar_prefetch = 3 : i64, scratch_operands = 0 : i64, tpu.core_type = #tpu.core_type<tc>, window_params = [{transform_indices = @transform_0, window_bounds = array<i64: 512, 1>}, {transform_indices = @transform_1, window_bounds = array<i64: 512, 1>}, {transform_indices = @transform_2, window_bounds = array<i64: 1, 256>}]} {
    %c11_i32 = arith.constant 11 : i32
    %0 = arith.muli %arg0, %c11_i32 : i32
    %1 = arith.addi %0, %arg1 : i32
    %2 = arith.index_cast %1 : i32 to index
    %3 = memref.load %arg4[%2] : memref<22xi32, #tpu.memory_space<smem>>
    %c2_i32 = arith.constant 2 : i32
    %4 = arith.cmpi eq, %3, %c2_i32 : i32
    %5 = arith.extui %4 : i1 to i32
    %c0_i32 = arith.constant 0 : i32
    %6 = arith.cmpi ne, %5, %c0_i32 : i32
    scf.if %6 {
      %cst = arith.constant 0.000000e+00 : f32
      %10 = vector.broadcast %cst : f32 to vector<1x256xf32>
      %c0 = arith.constant 0 : index
      %c0_1 = arith.constant 0 : index
      %11 = vector.load %arg7[%c0, %c0_1] : memref<1x256xf32, #tpu.memory_space<vmem>>, vector<1x256xf32>
      tpu.vector_store %arg7[%c0, %c0_1], %10 {strides = array<i32>} : memref<1x256xf32, #tpu.memory_space<vmem>>, vector<1x256xf32>,
    } else {
    }
    %c1_i32 = arith.constant 1 : i32
    %7 = arith.cmpi sge, %3, %c1_i32 : i32
    %8 = arith.extui %7 : i1 to i32
    %c0_i32_0 = arith.constant 0 : i32
    %9 = arith.cmpi ne, %8, %c0_i32_0 : i32
    scf.if %9 {
      %10 = arith.index_cast %1 : i32 to index
      %11 = memref.load %arg2[%10] : memref<22xi32, #tpu.memory_space<smem>>
      %c256_i32 = arith.constant 256 : i32
      %12 = arith.muli %11, %c256_i32 : i32
      %13 = tpu.iota {dimensions = array<i32: 1>} : vector<1x256xi32>
      %14 = vector.broadcast %12 : i32 to vector<1x256xi32>
      %15 = arith.addi %14, %13 : vector<1x256xi32>
      %c0 = arith.constant 0 : index
      %c0_1 = arith.constant 0 : index
      %16 = vector.load %arg5[%c0, %c0_1] : memref<512x1xi32, #tpu.memory_space<vmem>>, vector<512x1xi32>
      %17 = vector.broadcast %16 : vector<512x1xi32> to vector<512x256xi32>
      %18 = vector.broadcast %15 : vector<1x256xi32> to vector<512x256xi32>
      %19 = arith.cmpi eq, %17, %18 : vector<512x256xi32>
      %c0_2 = arith.constant 0 : index
      %c0_3 = arith.constant 0 : index
      %20 = vector.load %arg6[%c0_2, %c0_3] : memref<512x1xf32, #tpu.memory_space<vmem>>, vector<512x1xf32>
      %cst = arith.constant 0.000000e+00 : f32
      %21 = vector.shape_cast %20 : vector<512x1xf32> to vector<512x1xf32>
      %22 = vector.broadcast %21 : vector<512x1xf32> to vector<512x256xf32>
      %23 = vector.broadcast %cst : f32 to vector<512x256xf32>
      %24 = arith.select %19, %22, %23 : vector<512x256xi1>, vector<512x256xf32>
      %c0_4 = arith.constant 0 : index
      %c0_5 = arith.constant 0 : index
      %25 = vector.load %arg7[%c0_4, %c0_5] : memref<1x256xf32, #tpu.memory_space<vmem>>, vector<1x256xf32>
      %cst_6 = arith.constant dense<0.000000e+00> : vector<256xf32>
      %26 = vector.multi_reduction <add>, %24, %cst_6 [0] : vector<512x256xf32> to vector<256xf32>
      %27 = vector.shape_cast %26 : vector<256xf32> to vector<1x256xf32>
      %28 = arith.addf %25, %27 : vector<1x256xf32>
      %c0_7 = arith.constant 0 : index
      %c0_8 = arith.constant 0 : index
      %29 = vector.load %arg7[%c0_7, %c0_8] : memref<1x256xf32, #tpu.memory_space<vmem>>, vector<1x256xf32>
      tpu.vector_store %arg7[%c0_7, %c0_8], %28 {strides = array<i32>} : memref<1x256xf32, #tpu.memory_space<vmem>>, vector<1x256xf32>,
    } else {
    }
    return
  }
  func.func @transform_0(%arg0: i32, %arg1: i32, %arg2: memref<22xi32, #tpu.memory_space<smem>>, %arg3: memref<22xi32, #tpu.memory_space<smem>>, %arg4: memref<22xi32, #tpu.memory_space<smem>>) -> (i32, i32) {
    %c11_i32 = arith.constant 11 : i32
    %0 = arith.muli %arg0, %c11_i32 : i32
    %1 = arith.addi %0, %arg1 : i32
    %2 = arith.index_cast %1 : i32 to index
    %3 = memref.load %arg3[%2] : memref<22xi32, #tpu.memory_space<smem>>
    %c0_i32 = arith.constant 0 : i32
    %c0_i32_0 = arith.constant 0 : i32
    return %3, %c0_i32 : i32, i32
  }
  func.func @transform_1(%arg0: i32, %arg1: i32, %arg2: memref<22xi32, #tpu.memory_space<smem>>, %arg3: memref<22xi32, #tpu.memory_space<smem>>, %arg4: memref<22xi32, #tpu.memory_space<smem>>) -> (i32, i32) {
    %c11_i32 = arith.constant 11 : i32
    %0 = arith.muli %arg0, %c11_i32 : i32
    %1 = arith.addi %0, %arg1 : i32
    %2 = arith.index_cast %1 : i32 to index
    %3 = memref.load %arg3[%2] : memref<22xi32, #tpu.memory_space<smem>>
    %c0_i32 = arith.constant 0 : i32
    %c0_i32_0 = arith.constant 0 : i32
    return %3, %c0_i32 : i32, i32
  }
  func.func @transform_2(%arg0: i32, %arg1: i32, %arg2: memref<22xi32, #tpu.memory_space<smem>>, %arg3: memref<22xi32, #tpu.memory_space<smem>>, %arg4: memref<22xi32, #tpu.memory_space<smem>>) -> (i32, i32) {
    %c11_i32 = arith.constant 11 : i32
    %0 = arith.muli %arg0, %c11_i32 : i32
    %1 = arith.addi %0, %arg1 : i32
    %2 = arith.index_cast %1 : i32 to index
    %3 = memref.load %arg2[%2] : memref<22xi32, #tpu.memory_space<smem>>
    %c0_i32 = arith.constant 0 : i32
    %c0_i32_0 = arith.constant 0 : i32
    return %c0_i32, %3 : i32, i32
  }
}

</mosaic_0001>

<llo_original>
// kernel: fwd.1
$region0: #{fwd.1}
  #allocation0 [shape = 'u32[]', space=smem, size = 0x4, offset = 0x4, fixed_abs, tag = 'smem constant byte address 0x4 - core index']
  #allocation1 [shape = 'u32[144,128]{1,0:T(1,128)}', space=vmem, size = 0x12000, scoped, tag = 'internal scratch']
  #allocation2 [shape = 's32[1]{0}', space=sflag, size = 0x4, scoped, tag = 'scoped memory for fwd.1']
  #allocation3 [shape = 'u8[512]{0}', space=smem, size = 0x200, scoped, tag = 'prefetched SMEM operand 0']
  #allocation4 [shape = 'u8[512]{0}', space=smem, size = 0x200, scoped, tag = 'prefetched SMEM operand 1']
  #allocation5 [shape = 'u8[512]{0}', space=smem, size = 0x200, scoped, tag = 'prefetched SMEM operand 2']
  %s0 = inlined_call_operand.vmem [shape: s32[22], index: 0, kind: input, shape index: {}]
  %s1 = inlined_call_operand.vmem [shape: s32[22], index: 1, kind: input, shape index: {}]
  %s2 = inlined_call_operand.vmem [shape: s32[22], index: 2, kind: input, shape index: {}]
  %s3 = inlined_call_operand.vmem [shape: s32[6144,1], index: 3, kind: input, shape index: {}]
  %s4 = inlined_call_operand.vmem [shape: f32[6144,1], index: 4, kind: input, shape index: {}]
  %s5 = inlined_call_operand.vmem [shape: f32[1,2560], index: 5, kind: output, shape index: {}]
  %s6 = sld [smem:[#allocation0]]
  $region49: #{fwd.1} parent=0
    _
  %s8 = ssub.s32 1, %s6
  %s9 = scalar_select 0, %s8, %s6
  %s10 = sshll.u32 %s0, 4
  %s11 = int_to_ptr.vmem [resolvable:$true] %s10
  %13 = dma.vmem_to_smem %s11, 16, [#allocation3], [#allocation2]
  %s14 = sshll.u32 %s1, 4
  %s15 = int_to_ptr.vmem [resolvable:$true] %s14
  %17 = dma.vmem_to_smem %s15, 16, [#allocation4], [#allocation2]
  %s18 = sshll.u32 %s2, 4
  %s19 = int_to_ptr.vmem [resolvable:$true] %s18
  %21 = dma.vmem_to_smem %s19, 16, [#allocation5], [#allocation2]
  %22 = dma.done [#allocation2], 48
  %23 = sfence
  loop: start=0, step=1, limit=24
  $region2: #{fwd.1} parent=0 // loop_pre_header
    _
  $region3: #{fwd.1} parent=0 // loop_header
    %s25 = sphi 0, %s29
    %p26 = scmp.ge.s32.totalorder %s25, 24
    %s32 = sphi 0, %s44
    %s33 = sphi 0, %s40
    %s34 = sphi 0, %s32
    %s35 = sphi 0, %s33
    %s36 = sphi 0, %s34
    %s37 = sphi 0, %s35
    %s53 = sphi 0, %s55
    %s56 = sphi 0, %s53
    %s57 = sphi 0, %s56
    %s73 = sphi 0, %s57
    %s85 = sphi 0, %s87
    %s88 = sphi 0, %s85
    %s89 = sphi 0, %s88
    %s105 = sphi 0, %s89
    %s117 = sphi 0, %s119
    %s120 = sphi 0, %s117
    %s121 = sphi 0, %s120
    %s137 = sphi 0, %s121
  $region4: #{fwd.1} parent=0 // loop_header_branch
    %28 = sbr.rel (%p26) target = $region8
  $region5: #{fwd.1} parent=0 // loop_body
    %s30 = ssub.s32 %s25, 1
    %s31 = ssub.s32 %s25, 2
    %s38 = sadd.s32 1, %s33
    %p39 = scmp.ge.s32.totalorder %s38, 11
    %s40 = scalar_select %p39, 0, %s38
    %s41 = sadd.s32 1, %s32
    %s42 = scalar_select %p39, %s41, %s32
    %p43 = scmp.ge.s32.totalorder %s42, 2
    %s44 = scalar_select %p43, 0, %s42
    %s45 = smul.u32 %s32, 11
    %s46 = sadd.s32 %s45, %s33
    %s47 = sld [smem:[#allocation4 + %s46]]
    %s48 = smul.u32 %s44, 11
    %s49 = sadd.s32 %s48, %s40
    %s50 = sld [smem:[#allocation4 + %s49]]
    %s51 = ssub.s32 %s47, %s50
    %p52 = scmp.eq.s32.totalorder %s51, 0
    %s54 = sadd.s32 %s53, 1
    %s55 = scalar_select %p52, %s53, %s54
    %p58 = pneg %p52
    %p59 = scmp.eq.s32.totalorder %s25, 21
    %p60 = por %p58, %p59
    %p61 = scmp.ne.s32.totalorder %s53, %s56
    %p62 = scmp.eq.s32.totalorder %s25, 0
    %p63 = por %p61, %p62
    %p64 = scmp.ne.s32.totalorder %s53, %s56
    %p65 = scmp.eq.s32.totalorder %s30, 21
    %p66 = por %p64, %p65
    %p67 = scmp.ne.s32.totalorder %s56, %s57
    %p68 = scmp.eq.s32.totalorder %s30, 0
    %p69 = por %p67, %p68
    %p70 = scmp.ne.s32.totalorder %s56, %s57
    %p71 = scmp.eq.s32.totalorder %s31, 21
    %p72 = por %p70, %p71
    %p74 = scmp.ne.s32.totalorder %s57, %s73
    %p75 = scmp.eq.s32.totalorder %s31, 0
    %p76 = por %p74, %p75
    %s77 = smul.u32 %s32, 11
    %s78 = sadd.s32 %s77, %s33
    %s79 = sld [smem:[#allocation4 + %s78]]
    %s80 = smul.u32 %s44, 11
    %s81 = sadd.s32 %s80, %s40
    %s82 = sld [smem:[#allocation4 + %s81]]
    %s83 = ssub.s32 %s79, %s82
    %p84 = scmp.eq.s32.totalorder %s83, 0
    %s86 = sadd.s32 %s85, 1
    %s87 = scalar_select %p84, %s85, %s86
    %p90 = pneg %p84
    %p91 = scmp.eq.s32.totalorder %s25, 21
    %p92 = por %p90, %p91
    %p93 = scmp.ne.s32.totalorder %s85, %s88
    %p94 = scmp.eq.s32.totalorder %s25, 0
    %p95 = por %p93, %p94
    %p96 = scmp.ne.s32.totalorder %s85, %s88
    %p97 = scmp.eq.s32.totalorder %s30, 21
    %p98 = por %p96, %p97
    %p99 = scmp.ne.s32.totalorder %s88, %s89
    %p100 = scmp.eq.s32.totalorder %s30, 0
    %p101 = por %p99, %p100
    %p102 = scmp.ne.s32.totalorder %s88, %s89
    %p103 = scmp.eq.s32.totalorder %s31, 21
    %p104 = por %p102, %p103
    %p106 = scmp.ne.s32.totalorder %s89, %s105
    %p107 = scmp.eq.s32.totalorder %s31, 0
    %p108 = por %p106, %p107
    %s109 = smul.u32 %s32, 11
    %s110 = sadd.s32 %s109, %s33
    %s111 = sld [smem:[#allocation3 + %s110]]
    %s112 = smul.u32 %s44, 11
    %s113 = sadd.s32 %s112, %s40
    %s114 = sld [smem:[#allocation3 + %s113]]
    %s115 = ssub.s32 %s111, %s114
    %p116 = scmp.eq.s32.totalorder %s115, 0
    %s118 = sadd.s32 %s117, 1
    %s119 = scalar_select %p116, %s117, %s118
    %p122 = pneg %p116
    %p123 = scmp.eq.s32.totalorder %s25, 21
    %p124 = por %p122, %p123
    %p125 = scmp.ne.s32.totalorder %s117, %s120
    %p126 = scmp.eq.s32.totalorder %s25, 0
    %p127 = por %p125, %p126
    %p128 = scmp.ne.s32.totalorder %s117, %s120
    %p129 = scmp.eq.s32.totalorder %s30, 21
    %p130 = por %p128, %p129
    %p131 = scmp.ne.s32.totalorder %s120, %s121
    %p132 = scmp.eq.s32.totalorder %s30, 0
    %p133 = por %p131, %p132
    %p134 = scmp.ne.s32.totalorder %s120, %s121
    %p135 = scmp.eq.s32.totalorder %s31, 21
    %p136 = por %p134, %p135
    %p138 = scmp.ne.s32.totalorder %s121, %s137
    %p139 = scmp.eq.s32.totalorder %s31, 0
    %p140 = por %p138, %p139
    %p141 = scmp.le.s32.totalorder 1, %s25
    %p142 = scmp.lt.s32.totalorder %s25, 23
    %p143 = pnand %p141, %p142
    %p144 = pneg %p143
    // Predicated region
    $region9: #{fwd.1} parent=5 // pred_check
      _
    $region10: #{fwd.1} parent=5 // pred_check_branch
      %146 = sbr.rel (%p143) target = $region12
    $region11: #{fwd.1} parent=5 // pred_region
      %s147 = ssub.s32 %s25, 1
    $region12: #{fwd.1} parent=5 // pred_fallthru
      _
    %p148 = scmp.lt.s32.totalorder %s25, 22
    // Predicated region
    $region13: #{fwd.1} parent=5 // pred_check
      %p149 = pneg %p148
    $region14: #{fwd.1} parent=5 // pred_check_branch
      %151 = sbr.rel (%p149) target = $region16
    $region15: #{fwd.1} parent=5 // pred_region
      // Predicated region
      $region17: #{fwd.1} parent=15 // pred_check
        %p152 = pneg %p63
      $region18: #{fwd.1} parent=15 // pred_check_branch
        %154 = sbr.rel (%p152) target = $region20
      $region19: #{fwd.1} parent=15 // pred_region
        %s155 = smul.u32 %s32, 11
        %s156 = sadd.s32 %s155, %s33
        %s157 = sld [smem:[#allocation4 + %s156]]
        %s158 = smul.u32 64, %s157
        %p159 = scmp.lt.s32.totalorder %s158, 767
        %s160 = scalar_select %p159, %s158, 767
        %s161 = smul.addr %s160, 8
        %s162 = scalar_lea.vmem %s3, %s161
        %s163 = smul.u32 %s32, 11
        %s164 = sadd.s32 %s163, %s33
        %s165 = sld [smem:[#allocation4 + %s164]]
        %s166 = smul.u32 64, %s165
      $region20: #{fwd.1} parent=15 // pred_fallthru
        _
      // Predicated region
      $region21: #{fwd.1} parent=15 // pred_check
        %p167 = pneg %p95
      $region22: #{fwd.1} parent=15 // pred_check_branch
        %169 = sbr.rel (%p167) target = $region24
      $region23: #{fwd.1} parent=15 // pred_region
        %s170 = smul.u32 %s32, 11
        %s171 = sadd.s32 %s170, %s33
        %s172 = sld [smem:[#allocation4 + %s171]]
        %s173 = smul.u32 64, %s172
        %p174 = scmp.lt.s32.totalorder %s173, 767
        %s175 = scalar_select %p174, %s173, 767
        %s176 = smul.addr %s175, 8
        %s177 = scalar_lea.vmem %s4, %s176
        %s178 = smul.u32 %s32, 11
        %s179 = sadd.s32 %s178, %s33
        %s180 = sld [smem:[#allocation4 + %s179]]
        %s181 = smul.u32 64, %s180
      $region24: #{fwd.1} parent=15 // pred_fallthru
        _
    $region16: #{fwd.1} parent=5 // pred_fallthru
      _
    %p182 = scmp.le.s32.totalorder 1, %s25
    %p183 = scmp.lt.s32.totalorder %s25, 23
    %p184 = pnand %p182, %p183
    %p185 = pneg %p184
    // Predicated region
    $region25: #{fwd.1} parent=5 // pred_check
      _
    $region26: #{fwd.1} parent=5 // pred_check_branch
      %187 = sbr.rel (%p184) target = $region28
    $region27: #{fwd.1} parent=5 // pred_region
      %s188 = ssub.s32 %s25, 1
      %s189 = smul.u32 %s34, 11
      %s190 = sadd.s32 %s189, %s35
      %s191 = sld [smem:[#allocation4 + %s190]]
      %s192 = smul.u32 64, %s191
      %p193 = scmp.lt.s32.totalorder %s192, 767
      %s194 = scalar_select %p193, %s192, 767
      %s195 = smul.addr %s194, 8
      %s196 = scalar_lea.vmem %s3, %s195
      %p197 = pneg %p69
      %p198 = pneg %p66
      %s199 = smul.u32 %s34, 11
      %s200 = sadd.s32 %s199, %s35
      %s201 = sld [smem:[#allocation4 + %s200]]
      %s202 = smul.u32 64, %s201
      %p203 = scmp.lt.s32.totalorder %s202, 767
      %s204 = scalar_select %p203, %s202, 767
      %s205 = smul.addr %s204, 8
      %s206 = scalar_lea.vmem %s4, %s205
      %p207 = pneg %p101
      %p208 = pneg %p98
      %p209 = pneg %p133
      %p210 = pneg %p130
      %s211 = smul.u32 %s34, 11
      %s212 = sadd.s32 %s211, %s35
      %s213 = sld [smem:[#allocation3 + %s212]]
      %s214 = smul.u32 2, %s213
      %p215 = scmp.lt.s32.totalorder %s214, 19
      %s216 = scalar_select %p215, %s214, 19
      %s217 = scalar_lea.vmem %s5, %s216
      %s218 = smul.u32 %s34, 11
      %s219 = sadd.s32 %s218, %s35
      %s220 = sld [smem:[#allocation4 + %s219]]
      %s221 = smul.u32 64, %s220
      %p222 = scmp.lt.s32.totalorder %s221, 767
      %s223 = scalar_select %p222, %s221, 767
      %s224 = smul.addr %s223, 8
      %s225 = scalar_lea.vmem %s3, %s224
      %s226 = smul.u32 %s34, 11
      %s227 = sadd.s32 %s226, %s35
      %s228 = sld [smem:[#allocation4 + %s227]]
      %s229 = smul.u32 64, %s228
      %s230 = smul.u32 %s34, 11
      %s231 = sadd.s32 %s230, %s35
      %s232 = sld [smem:[#allocation4 + %s231]]
      %s233 = smul.u32 64, %s232
      %p234 = scmp.lt.s32.totalorder %s233, 767
      %s235 = scalar_select %p234, %s233, 767
      %s236 = smul.addr %s235, 8
      %s237 = scalar_lea.vmem %s4, %s236
      %s238 = smul.u32 %s34, 11
      %s239 = sadd.s32 %s238, %s35
      %s240 = sld [smem:[#allocation4 + %s239]]
      %s241 = smul.u32 64, %s240
      %s242 = smul.u32 %s34, 11
      %s243 = sadd.s32 %s242, %s35
      %s244 = sld [smem:[#allocation3 + %s243]]
      %s245 = smul.u32 2, %s244
      %p246 = scmp.lt.s32.totalorder %s245, 19
      %s247 = scalar_select %p246, %s245, 19
      %s248 = scalar_lea.vmem %s5, %s247
      %s249 = smul.u32 %s34, 11
      %s250 = sadd.s32 %s249, %s35
      %s251 = sld [smem:[#allocation3 + %s250]]
      %s252 = smul.u32 2, %s251
      %s253 = smul.u32 %s34, 11
      %s254 = sadd.s32 %s253, %s35
      %s255 = sld [smem:[#allocation5 + %s254]]
      %p256 = scmp.eq.s32.totalorder %s255, 2
      // Predicated region
      $region29: #{fwd.1} parent=27 // pred_check
        %p257 = pneg %p256
      $region30: #{fwd.1} parent=27 // pred_check_branch
        %259 = sbr.rel (%p257) target = $region32
      $region31: #{fwd.1} parent=27 // pred_region
        %v260 = vlaneseq
        %vm261 = vcmp.ge.s32.totalorder %v260, 0
        %vm262 = vcmp.lt.s32.totalorder %v260, 256
        %vm263 = vmand %vm261, %vm262
        %264 = vst.msk [vmem:[%s248] sm:$0x3] %vm263, 0.0
      $region32: #{fwd.1} parent=27 // pred_fallthru
        _
      %p265 = scmp.ge.s32.totalorder %s255, 1
      // Predicated region
      $region33: #{fwd.1} parent=27 // pred_check
        %p266 = pneg %p265
      $region34: #{fwd.1} parent=27 // pred_check_branch
        %268 = sbr.rel (%p266) target = $region36
      $region35: #{fwd.1} parent=27 // pred_region
        %s269 = sld [smem:[#allocation3 + %s254]]
        %s270 = smul.u32 %s269, 256
        %v271 = vlaneseq
        %v272 = vand.u32 %v271, 127
        %v273 = vadd.s32 %v272, 128
        %v274 = vstv %s270
        %v275 = vadd.s32 %v274, %v272
        %v276 = vadd.s32 %v274, %v273
        %v277 = vld [vmem:[%s225] sm:$0xff]
        %v278 = vld [vmem:[%s225 + $0x8] sm:$0xff]
        %v279 = vld [vmem:[%s225 + $0x10] sm:$0xff]
        %v280 = vld [vmem:[%s225 + $0x18] sm:$0xff]
        %v281 = vld [vmem:[%s225 + $0x20] sm:$0xff]
        %v282 = vld [vmem:[%s225 + $0x28] sm:$0xff]
        %v283 = vld [vmem:[%s225 + $0x30] sm:$0xff]
        %v284 = vld [vmem:[%s225 + $0x38] sm:$0xff]
        %v285 = vld [vmem:[%s225 + $0x40] sm:$0xff]
        %v286 = vld [vmem:[%s225 + $0x48] sm:$0xff]
        %v287 = vld [vmem:[%s225 + $0x50] sm:$0xff]
        %v288 = vld [vmem:[%s225 + $0x58] sm:$0xff]
        %v289 = vld [vmem:[%s225 + $0x60] sm:$0xff]
        %v290 = vld [vmem:[%s225 + $0x68] sm:$0xff]
        %v291 = vld [vmem:[%s225 + $0x70] sm:$0xff]
        %v292 = vld [vmem:[%s225 + $0x78] sm:$0xff]
        %v293 = vld [vmem:[%s225 + $0x80] sm:$0xff]
        %v294 = vld [vmem:[%s225 + $0x88] sm:$0xff]
        %v295 = vld [vmem:[%s225 + $0x90] sm:$0xff]
        %v296 = vld [vmem:[%s225 + $0x98] sm:$0xff]
        %v297 = vld [vmem:[%s225 + $0xa0] sm:$0xff]
        %v298 = vld [vmem:[%s225 + $0xa8] sm:$0xff]
        %v299 = vld [vmem:[%s225 + $0xb0] sm:$0xff]
        %v300 = vld [vmem:[%s225 + $0xb8] sm:$0xff]
        %v301 = vld [vmem:[%s225 + $0xc0] sm:$0xff]
        %v302 = vld [vmem:[%s225 + $0xc8] sm:$0xff]
        %v303 = vld [vmem:[%s225 + $0xd0] sm:$0xff]
        %v304 = vld [vmem:[%s225 + $0xd8] sm:$0xff]
        %v305 = vld [vmem:[%s225 + $0xe0] sm:$0xff]
        %v306 = vld [vmem:[%s225 + $0xe8] sm:$0xff]
        %v307 = vld [vmem:[%s225 + $0xf0] sm:$0xff]
        %v308 = vld [vmem:[%s225 + $0xf8] sm:$0xff]
        %v309 = vld [vmem:[%s225 + $0x100] sm:$0xff]
        %v310 = vld [vmem:[%s225 + $0x108] sm:$0xff]
        %v311 = vld [vmem:[%s225 + $0x110] sm:$0xff]
        %v312 = vld [vmem:[%s225 + $0x118] sm:$0xff]
        %v313 = vld [vmem:[%s225 + $0x120] sm:$0xff]
        %v314 = vld [vmem:[%s225 + $0x128] sm:$0xff]
        %v315 = vld [vmem:[%s225 + $0x130] sm:$0xff]
        %v316 = vld [vmem:[%s225 + $0x138] sm:$0xff]
        %v317 = vld [vmem:[%s225 + $0x140] sm:$0xff]
        %v318 = vld [vmem:[%s225 + $0x148] sm:$0xff]
        %v319 = vld [vmem:[%s225 + $0x150] sm:$0xff]
        %v320 = vld [vmem:[%s225 + $0x158] sm:$0xff]
        %v321 = vld [vmem:[%s225 + $0x160] sm:$0xff]
        %v322 = vld [vmem:[%s225 + $0x168] sm:$0xff]
        %v323 = vld [vmem:[%s225 + $0x170] sm:$0xff]
        %v324 = vld [vmem:[%s225 + $0x178] sm:$0xff]
        %v325 = vld [vmem:[%s225 + $0x180] sm:$0xff]
        %v326 = vld [vmem:[%s225 + $0x188] sm:$0xff]
        %v327 = vld [vmem:[%s225 + $0x190] sm:$0xff]
        %v328 = vld [vmem:[%s225 + $0x198] sm:$0xff]
        %v329 = vld [vmem:[%s225 + $0x1a0] sm:$0xff]
        %v330 = vld [vmem:[%s225 + $0x1a8] sm:$0xff]
        %v331 = vld [vmem:[%s225 + $0x1b0] sm:$0xff]
        %v332 = vld [vmem:[%s225 + $0x1b8] sm:$0xff]
        %v333 = vld [vmem:[%s225 + $0x1c0] sm:$0xff]
        %v334 = vld [vmem:[%s225 + $0x1c8] sm:$0xff]
        %v335 = vld [vmem:[%s225 + $0x1d0] sm:$0xff]
        %v336 = vld [vmem:[%s225 + $0x1d8] sm:$0xff]
        %v337 = vld [vmem:[%s225 + $0x1e0] sm:$0xff]
        %v338 = vld [vmem:[%s225 + $0x1e8] sm:$0xff]
        %v339 = vld [vmem:[%s225 + $0x1f0] sm:$0xff]
        %v340 = vld [vmem:[%s225 + $0x1f8] sm:$0xff]
        %341 = vset.pattern.permute.xlu0 0
        %342 = vperm.xlu0 %341, %v277
        %v343 = vpop.permute.xlu0 %342
        %344 = vset.pattern.permute.xlu0 0
        %345 = vperm.xlu0 %344, %v278
        %v346 = vpop.permute.xlu0 %345
        %347 = vset.pattern.permute.xlu0 0
        %348 = vperm.xlu0 %347, %v279
        %v349 = vpop.permute.xlu0 %348
        %350 = vset.pattern.permute.xlu0 0
        %351 = vperm.xlu0 %350, %v280
        %v352 = vpop.permute.xlu0 %351
        %353 = vset.pattern.permute.xlu0 0
        %354 = vperm.xlu0 %353, %v281
        %v355 = vpop.permute.xlu0 %354
        %356 = vset.pattern.permute.xlu0 0
        %357 = vperm.xlu0 %356, %v282
        %v358 = vpop.permute.xlu0 %357
        %359 = vset.pattern.permute.xlu0 0
        %360 = vperm.xlu0 %359, %v283
        %v361 = vpop.permute.xlu0 %360
        %362 = vset.pattern.permute.xlu0 0
        %363 = vperm.xlu0 %362, %v284
        %v364 = vpop.permute.xlu0 %363
        %365 = vset.pattern.permute.xlu0 0
        %366 = vperm.xlu0 %365, %v285
        %v367 = vpop.permute.xlu0 %366
        %368 = vset.pattern.permute.xlu0 0
        %369 = vperm.xlu0 %368, %v286
        %v370 = vpop.permute.xlu0 %369
        %371 = vset.pattern.permute.xlu0 0
        %372 = vperm.xlu0 %371, %v287
        %v373 = vpop.permute.xlu0 %372
        %374 = vset.pattern.permute.xlu0 0
        %375 = vperm.xlu0 %374, %v288
        %v376 = vpop.permute.xlu0 %375
        %377 = vset.pattern.permute.xlu0 0
        %378 = vperm.xlu0 %377, %v289
        %v379 = vpop.permute.xlu0 %378
        %380 = vset.pattern.permute.xlu0 0
        %381 = vperm.xlu0 %380, %v290
        %v382 = vpop.permute.xlu0 %381
        %383 = vset.pattern.permute.xlu0 0
        %384 = vperm.xlu0 %383, %v291
        %v385 = vpop.permute.xlu0 %384
        %386 = vset.pattern.permute.xlu0 0
        %387 = vperm.xlu0 %386, %v292
        %v388 = vpop.permute.xlu0 %387
        %389 = vset.pattern.permute.xlu0 0
        %390 = vperm.xlu0 %389, %v293
        %v391 = vpop.permute.xlu0 %390
        %392 = vset.pattern.permute.xlu0 0
        %393 = vperm.xlu0 %392, %v294
        %v394 = vpop.permute.xlu0 %393
        %395 = vset.pattern.permute.xlu0 0
        %396 = vperm.xlu0 %395, %v295
        %v397 = vpop.permute.xlu0 %396
        %398 = vset.pattern.permute.xlu0 0
        %399 = vperm.xlu0 %398, %v296
        %v400 = vpop.permute.xlu0 %399
        %401 = vset.pattern.permute.xlu0 0
        %402 = vperm.xlu0 %401, %v297
        %v403 = vpop.permute.xlu0 %402
        %404 = vset.pattern.permute.xlu0 0
        %405 = vperm.xlu0 %404, %v298
        %v406 = vpop.permute.xlu0 %405
        %407 = vset.pattern.permute.xlu0 0
        %408 = vperm.xlu0 %407, %v299
        %v409 = vpop.permute.xlu0 %408
        %410 = vset.pattern.permute.xlu0 0
        %411 = vperm.xlu0 %410, %v300
        %v412 = vpop.permute.xlu0 %411
        %413 = vset.pattern.permute.xlu0 0
        %414 = vperm.xlu0 %413, %v301
        %v415 = vpop.permute.xlu0 %414
        %416 = vset.pattern.permute.xlu0 0
        %417 = vperm.xlu0 %416, %v302
        %v418 = vpop.permute.xlu0 %417
        %419 = vset.pattern.permute.xlu0 0
        %420 = vperm.xlu0 %419, %v303
        %v421 = vpop.permute.xlu0 %420
        %422 = vset.pattern.permute.xlu0 0
        %423 = vperm.xlu0 %422, %v304
        %v424 = vpop.permute.xlu0 %423
        %425 = vset.pattern.permute.xlu0 0
        %426 = vperm.xlu0 %425, %v305
        %v427 = vpop.permute.xlu0 %426
        %428 = vset.pattern.permute.xlu0 0
        %429 = vperm.xlu0 %428, %v306
        %v430 = vpop.permute.xlu0 %429
        %431 = vset.pattern.permute.xlu0 0
        %432 = vperm.xlu0 %431, %v307
        %v433 = vpop.permute.xlu0 %432
        %434 = vset.pattern.permute.xlu0 0
        %435 = vperm.xlu0 %434, %v308
        %v436 = vpop.permute.xlu0 %435
        %437 = vset.pattern.permute.xlu0 0
        %438 = vperm.xlu0 %437, %v309
        %v439 = vpop.permute.xlu0 %438
        %440 = vset.pattern.permute.xlu0 0
        %441 = vperm.xlu0 %440, %v310
        %v442 = vpop.permute.xlu0 %441
        %443 = vset.pattern.permute.xlu0 0
        %444 = vperm.xlu0 %443, %v311
        %v445 = vpop.permute.xlu0 %444
        %446 = vset.pattern.permute.xlu0 0
        %447 = vperm.xlu0 %446, %v312
        %v448 = vpop.permute.xlu0 %447
        %449 = vset.pattern.permute.xlu0 0
        %450 = vperm.xlu0 %449, %v313
        %v451 = vpop.permute.xlu0 %450
        %452 = vset.pattern.permute.xlu0 0
        %453 = vperm.xlu0 %452, %v314
        %v454 = vpop.permute.xlu0 %453
        %455 = vset.pattern.permute.xlu0 0
        %456 = vperm.xlu0 %455, %v315
        %v457 = vpop.permute.xlu0 %456
        %458 = vset.pattern.permute.xlu0 0
        %459 = vperm.xlu0 %458, %v316
        %v460 = vpop.permute.xlu0 %459
        %461 = vset.pattern.permute.xlu0 0
        %462 = vperm.xlu0 %461, %v317
        %v463 = vpop.permute.xlu0 %462
        %464 = vset.pattern.permute.xlu0 0
        %465 = vperm.xlu0 %464, %v318
        %v466 = vpop.permute.xlu0 %465
        %467 = vset.pattern.permute.xlu0 0
        %468 = vperm.xlu0 %467, %v319
        %v469 = vpop.permute.xlu0 %468
        %470 = vset.pattern.permute.xlu0 0
        %471 = vperm.xlu0 %470, %v320
        %v472 = vpop.permute.xlu0 %471
        %473 = vset.pattern.permute.xlu0 0
        %474 = vperm.xlu0 %473, %v321
        %v475 = vpop.permute.xlu0 %474
        %476 = vset.pattern.permute.xlu0 0
        %477 = vperm.xlu0 %476, %v322
        %v478 = vpop.permute.xlu0 %477
        %479 = vset.pattern.permute.xlu0 0
        %480 = vperm.xlu0 %479, %v323
        %v481 = vpop.permute.xlu0 %480
        %482 = vset.pattern.permute.xlu0 0
        %483 = vperm.xlu0 %482, %v324
        %v484 = vpop.permute.xlu0 %483
        %485 = vset.pattern.permute.xlu0 0
        %486 = vperm.xlu0 %485, %v325
        %v487 = vpop.permute.xlu0 %486
        %488 = vset.pattern.permute.xlu0 0
        %489 = vperm.xlu0 %488, %v326
        %v490 = vpop.permute.xlu0 %489
        %491 = vset.pattern.permute.xlu0 0
        %492 = vperm.xlu0 %491, %v327
        %v493 = vpop.permute.xlu0 %492
        %494 = vset.pattern.permute.xlu0 0
        %495 = vperm.xlu0 %494, %v328
        %v496 = vpop.permute.xlu0 %495
        %497 = vset.pattern.permute.xlu0 0
        %498 = vperm.xlu0 %497, %v329
        %v499 = vpop.permute.xlu0 %498
        %500 = vset.pattern.permute.xlu0 0
        %501 = vperm.xlu0 %500, %v330
        %v502 = vpop.permute.xlu0 %501
        %503 = vset.pattern.permute.xlu0 0
        %504 = vperm.xlu0 %503, %v331
        %v505 = vpop.permute.xlu0 %504
        %506 = vset.pattern.permute.xlu0 0
        %507 = vperm.xlu0 %506, %v332
        %v508 = vpop.permute.xlu0 %507
        %509 = vset.pattern.permute.xlu0 0
        %510 = vperm.xlu0 %509, %v333
        %v511 = vpop.permute.xlu0 %510
        %512 = vset.pattern.permute.xlu0 0
        %513 = vperm.xlu0 %512, %v334
        %v514 = vpop.permute.xlu0 %513
        %515 = vset.pattern.permute.xlu0 0
        %516 = vperm.xlu0 %515, %v335
        %v517 = vpop.permute.xlu0 %516
        %518 = vset.pattern.permute.xlu0 0
        %519 = vperm.xlu0 %518, %v336
        %v520 = vpop.permute.xlu0 %519
        %521 = vset.pattern.permute.xlu0 0
        %522 = vperm.xlu0 %521, %v337
        %v523 = vpop.permute.xlu0 %522
        %524 = vset.pattern.permute.xlu0 0
        %525 = vperm.xlu0 %524, %v338
        %v526 = vpop.permute.xlu0 %525
        %527 = vset.pattern.permute.xlu0 0
        %528 = vperm.xlu0 %527, %v339
        %v529 = vpop.permute.xlu0 %528
        %530 = vset.pattern.permute.xlu0 0
        %531 = vperm.xlu0 %530, %v340
        %v532 = vpop.permute.xlu0 %531
        %vm533 = vcmp.eq.s32.totalorder %v343, %v275
        %vm534 = vcmp.eq.s32.totalorder %v343, %v276
        %vm535 = vcmp.eq.s32.totalorder %v346, %v275
        %vm536 = vcmp.eq.s32.totalorder %v346, %v276
        %vm537 = vcmp.eq.s32.totalorder %v349, %v275
        %vm538 = vcmp.eq.s32.totalorder %v349, %v276
        %vm539 = vcmp.eq.s32.totalorder %v352, %v275
        %vm540 = vcmp.eq.s32.totalorder %v352, %v276
        %vm541 = vcmp.eq.s32.totalorder %v355, %v275
        %vm542 = vcmp.eq.s32.totalorder %v355, %v276
        %vm543 = vcmp.eq.s32.totalorder %v358, %v275
        %vm544 = vcmp.eq.s32.totalorder %v358, %v276
        %vm545 = vcmp.eq.s32.totalorder %v361, %v275
        %vm546 = vcmp.eq.s32.totalorder %v361, %v276
        %vm547 = vcmp.eq.s32.totalorder %v364, %v275
        %vm548 = vcmp.eq.s32.totalorder %v364, %v276
        %vm549 = vcmp.eq.s32.totalorder %v367, %v275
        %vm550 = vcmp.eq.s32.totalorder %v367, %v276
        %vm551 = vcmp.eq.s32.totalorder %v370, %v275
        %vm552 = vcmp.eq.s32.totalorder %v370, %v276
        %vm553 = vcmp.eq.s32.totalorder %v373, %v275
        %vm554 = vcmp.eq.s32.totalorder %v373, %v276
        %vm555 = vcmp.eq.s32.totalorder %v376, %v275
        %vm556 = vcmp.eq.s32.totalorder %v376, %v276
        %vm557 = vcmp.eq.s32.totalorder %v379, %v275
        %vm558 = vcmp.eq.s32.totalorder %v379, %v276
        %vm559 = vcmp.eq.s32.totalorder %v382, %v275
        %vm560 = vcmp.eq.s32.totalorder %v382, %v276
        %vm561 = vcmp.eq.s32.totalorder %v385, %v275
        %vm562 = vcmp.eq.s32.totalorder %v385, %v276
        %vm563 = vcmp.eq.s32.totalorder %v388, %v275
        %vm564 = vcmp.eq.s32.totalorder %v388, %v276
        %vm565 = vcmp.eq.s32.totalorder %v391, %v275
        %vm566 = vcmp.eq.s32.totalorder %v391, %v276
        %vm567 = vcmp.eq.s32.totalorder %v394, %v275
        %vm568 = vcmp.eq.s32.totalorder %v394, %v276
        %vm569 = vcmp.eq.s32.totalorder %v397, %v275
        %vm570 = vcmp.eq.s32.totalorder %v397, %v276
        %vm571 = vcmp.eq.s32.totalorder %v400, %v275
        %vm572 = vcmp.eq.s32.totalorder %v400, %v276
        %vm573 = vcmp.eq.s32.totalorder %v403, %v275
        %vm574 = vcmp.eq.s32.totalorder %v403, %v276
        %vm575 = vcmp.eq.s32.totalorder %v406, %v275
        %vm576 = vcmp.eq.s32.totalorder %v406, %v276
        %vm577 = vcmp.eq.s32.totalorder %v409, %v275
        %vm578 = vcmp.eq.s32.totalorder %v409, %v276
        %vm579 = vcmp.eq.s32.totalorder %v412, %v275
        %vm580 = vcmp.eq.s32.totalorder %v412, %v276
        %vm581 = vcmp.eq.s32.totalorder %v415, %v275
        %vm582 = vcmp.eq.s32.totalorder %v415, %v276
        %vm583 = vcmp.eq.s32.totalorder %v418, %v275
        %vm584 = vcmp.eq.s32.totalorder %v418, %v276
        %vm585 = vcmp.eq.s32.totalorder %v421, %v275
        %vm586 = vcmp.eq.s32.totalorder %v421, %v276
        %vm587 = vcmp.eq.s32.totalorder %v424, %v275
        %vm588 = vcmp.eq.s32.totalorder %v424, %v276
        %vm589 = vcmp.eq.s32.totalorder %v427, %v275
        %vm590 = vcmp.eq.s32.totalorder %v427, %v276
        %vm591 = vcmp.eq.s32.totalorder %v430, %v275
        %vm592 = vcmp.eq.s32.totalorder %v430, %v276
        %vm593 = vcmp.eq.s32.totalorder %v433, %v275
        %vm594 = vcmp.eq.s32.totalorder %v433, %v276
        %vm595 = vcmp.eq.s32.totalorder %v436, %v275
        %vm596 = vcmp.eq.s32.totalorder %v436, %v276
        %vm597 = vcmp.eq.s32.totalorder %v439, %v275
        %vm598 = vcmp.eq.s32.totalorder %v439, %v276
        %vm599 = vcmp.eq.s32.totalorder %v442, %v275
        %vm600 = vcmp.eq.s32.totalorder %v442, %v276
        %vm601 = vcmp.eq.s32.totalorder %v445, %v275
        %vm602 = vcmp.eq.s32.totalorder %v445, %v276
        %vm603 = vcmp.eq.s32.totalorder %v448, %v275
        %vm604 = vcmp.eq.s32.totalorder %v448, %v276
        %vm605 = vcmp.eq.s32.totalorder %v451, %v275
        %vm606 = vcmp.eq.s32.totalorder %v451, %v276
        %vm607 = vcmp.eq.s32.totalorder %v454, %v275
        %vm608 = vcmp.eq.s32.totalorder %v454, %v276
        %vm609 = vcmp.eq.s32.totalorder %v457, %v275
        %vm610 = vcmp.eq.s32.totalorder %v457, %v276
        %vm611 = vcmp.eq.s32.totalorder %v460, %v275
        %vm612 = vcmp.eq.s32.totalorder %v460, %v276
        %vm613 = vcmp.eq.s32.totalorder %v463, %v275
        %vm614 = vcmp.eq.s32.totalorder %v463, %v276
        %vm615 = vcmp.eq.s32.totalorder %v466, %v275
        %vm616 = vcmp.eq.s32.totalorder %v466, %v276
        %vm617 = vcmp.eq.s32.totalorder %v469, %v275
        %vm618 = vcmp.eq.s32.totalorder %v469, %v276
        %vm619 = vcmp.eq.s32.totalorder %v472, %v275
        %vm620 = vcmp.eq.s32.totalorder %v472, %v276
        %vm621 = vcmp.eq.s32.totalorder %v475, %v275
        %vm622 = vcmp.eq.s32.totalorder %v475, %v276
        %vm623 = vcmp.eq.s32.totalorder %v478, %v275
        %vm624 = vcmp.eq.s32.totalorder %v478, %v276
        %vm625 = vcmp.eq.s32.totalorder %v481, %v275
        %vm626 = vcmp.eq.s32.totalorder %v481, %v276
        %vm627 = vcmp.eq.s32.totalorder %v484, %v275
        %vm628 = vcmp.eq.s32.totalorder %v484, %v276
        %vm629 = vcmp.eq.s32.totalorder %v487, %v275
        %vm630 = vcmp.eq.s32.totalorder %v487, %v276
        %vm631 = vcmp.eq.s32.totalorder %v490, %v275
        %vm632 = vcmp.eq.s32.totalorder %v490, %v276
        %vm633 = vcmp.eq.s32.totalorder %v493, %v275
        %vm634 = vcmp.eq.s32.totalorder %v493, %v276
        %vm635 = vcmp.eq.s32.totalorder %v496, %v275
        %vm636 = vcmp.eq.s32.totalorder %v496, %v276
        %vm637 = vcmp.eq.s32.totalorder %v499, %v275
        %vm638 = vcmp.eq.s32.totalorder %v499, %v276
        %vm639 = vcmp.eq.s32.totalorder %v502, %v275
        %vm640 = vcmp.eq.s32.totalorder %v502, %v276
        %vm641 = vcmp.eq.s32.totalorder %v505, %v275
        %vm642 = vcmp.eq.s32.totalorder %v505, %v276
        %vm643 = vcmp.eq.s32.totalorder %v508, %v275
        %vm644 = vcmp.eq.s32.totalorder %v508, %v276
        %vm645 = vcmp.eq.s32.totalorder %v511, %v275
        %vm646 = vcmp.eq.s32.totalorder %v511, %v276
        %vm647 = vcmp.eq.s32.totalorder %v514, %v275
        %vm648 = vcmp.eq.s32.totalorder %v514, %v276
        %vm649 = vcmp.eq.s32.totalorder %v517, %v275
        %vm650 = vcmp.eq.s32.totalorder %v517, %v276
        %vm651 = vcmp.eq.s32.totalorder %v520, %v275
        %vm652 = vcmp.eq.s32.totalorder %v520, %v276
        %vm653 = vcmp.eq.s32.totalorder %v523, %v275
        %vm654 = vcmp.eq.s32.totalorder %v523, %v276
        %vm655 = vcmp.eq.s32.totalorder %v526, %v275
        %vm656 = vcmp.eq.s32.totalorder %v526, %v276
        %vm657 = vcmp.eq.s32.totalorder %v529, %v275
        %vm658 = vcmp.eq.s32.totalorder %v529, %v276
        %vm659 = vcmp.eq.s32.totalorder %v532, %v275
        %vm660 = vcmp.eq.s32.totalorder %v532, %v276
        %v661 = vld [vmem:[%s237] sm:$0xff]
        %v662 = vld [vmem:[%s237 + $0x8] sm:$0xff]
        %v663 = vld [vmem:[%s237 + $0x10] sm:$0xff]
        %v664 = vld [vmem:[%s237 + $0x18] sm:$0xff]
        %v665 = vld [vmem:[%s237 + $0x20] sm:$0xff]
        %v666 = vld [vmem:[%s237 + $0x28] sm:$0xff]
        %v667 = vld [vmem:[%s237 + $0x30] sm:$0xff]
        %v668 = vld [vmem:[%s237 + $0x38] sm:$0xff]
        %v669 = vld [vmem:[%s237 + $0x40] sm:$0xff]
        %v670 = vld [vmem:[%s237 + $0x48] sm:$0xff]
        %v671 = vld [vmem:[%s237 + $0x50] sm:$0xff]
        %v672 = vld [vmem:[%s237 + $0x58] sm:$0xff]
        %v673 = vld [vmem:[%s237 + $0x60] sm:$0xff]
        %v674 = vld [vmem:[%s237 + $0x68] sm:$0xff]
        %v675 = vld [vmem:[%s237 + $0x70] sm:$0xff]
        %v676 = vld [vmem:[%s237 + $0x78] sm:$0xff]
        %v677 = vld [vmem:[%s237 + $0x80] sm:$0xff]
        %v678 = vld [vmem:[%s237 + $0x88] sm:$0xff]
        %v679 = vld [vmem:[%s237 + $0x90] sm:$0xff]
        %v680 = vld [vmem:[%s237 + $0x98] sm:$0xff]
        %v681 = vld [vmem:[%s237 + $0xa0] sm:$0xff]
        %v682 = vld [vmem:[%s237 + $0xa8] sm:$0xff]
        %v683 = vld [vmem:[%s237 + $0xb0] sm:$0xff]
        %v684 = vld [vmem:[%s237 + $0xb8] sm:$0xff]
        %v685 = vld [vmem:[%s237 + $0xc0] sm:$0xff]
        %v686 = vld [vmem:[%s237 + $0xc8] sm:$0xff]
        %v687 = vld [vmem:[%s237 + $0xd0] sm:$0xff]
        %v688 = vld [vmem:[%s237 + $0xd8] sm:$0xff]
        %v689 = vld [vmem:[%s237 + $0xe0] sm:$0xff]
        %v690 = vld [vmem:[%s237 + $0xe8] sm:$0xff]
        %v691 = vld [vmem:[%s237 + $0xf0] sm:$0xff]
        %v692 = vld [vmem:[%s237 + $0xf8] sm:$0xff]
        %v693 = vld [vmem:[%s237 + $0x100] sm:$0xff]
        %v694 = vld [vmem:[%s237 + $0x108] sm:$0xff]
        %v695 = vld [vmem:[%s237 + $0x110] sm:$0xff]
        %v696 = vld [vmem:[%s237 + $0x118] sm:$0xff]
        %v697 = vld [vmem:[%s237 + $0x120] sm:$0xff]
        %v698 = vld [vmem:[%s237 + $0x128] sm:$0xff]
        %v699 = vld [vmem:[%s237 + $0x130] sm:$0xff]
        %v700 = vld [vmem:[%s237 + $0x138] sm:$0xff]
        %v701 = vld [vmem:[%s237 + $0x140] sm:$0xff]
        %v702 = vld [vmem:[%s237 + $0x148] sm:$0xff]
        %v703 = vld [vmem:[%s237 + $0x150] sm:$0xff]
        %v704 = vld [vmem:[%s237 + $0x158] sm:$0xff]
        %v705 = vld [vmem:[%s237 + $0x160] sm:$0xff]
        %v706 = vld [vmem:[%s237 + $0x168] sm:$0xff]
        %v707 = vld [vmem:[%s237 + $0x170] sm:$0xff]
        %v708 = vld [vmem:[%s237 + $0x178] sm:$0xff]
        %v709 = vld [vmem:[%s237 + $0x180] sm:$0xff]
        %v710 = vld [vmem:[%s237 + $0x188] sm:$0xff]
        %v711 = vld [vmem:[%s237 + $0x190] sm:$0xff]
        %v712 = vld [vmem:[%s237 + $0x198] sm:$0xff]
        %v713 = vld [vmem:[%s237 + $0x1a0] sm:$0xff]
        %v714 = vld [vmem:[%s237 + $0x1a8] sm:$0xff]
        %v715 = vld [vmem:[%s237 + $0x1b0] sm:$0xff]
        %v716 = vld [vmem:[%s237 + $0x1b8] sm:$0xff]
        %v717 = vld [vmem:[%s237 + $0x1c0] sm:$0xff]
        %v718 = vld [vmem:[%s237 + $0x1c8] sm:$0xff]
        %v719 = vld [vmem:[%s237 + $0x1d0] sm:$0xff]
        %v720 = vld [vmem:[%s237 + $0x1d8] sm:$0xff]
        %v721 = vld [vmem:[%s237 + $0x1e0] sm:$0xff]
        %v722 = vld [vmem:[%s237 + $0x1e8] sm:$0xff]
        %v723 = vld [vmem:[%s237 + $0x1f0] sm:$0xff]
        %v724 = vld [vmem:[%s237 + $0x1f8] sm:$0xff]
        %726 = vset.pattern.permute.xlu0 0
        %727 = vperm.xlu0 %726, %v661
        %v728 = vpop.permute.xlu0 %727
        %731 = vset.pattern.permute.xlu0 0
        %732 = vperm.xlu0 %731, %v662
        %v733 = vpop.permute.xlu0 %732
        %736 = vset.pattern.permute.xlu0 0
        %737 = vperm.xlu0 %736, %v663
        %v738 = vpop.permute.xlu0 %737
        %741 = vset.pattern.permute.xlu0 0
        %742 = vperm.xlu0 %741, %v664
        %v743 = vpop.permute.xlu0 %742
        %746 = vset.pattern.permute.xlu0 0
        %747 = vperm.xlu0 %746, %v665
        %v748 = vpop.permute.xlu0 %747
        %751 = vset.pattern.permute.xlu0 0
        %752 = vperm.xlu0 %751, %v666
        %v753 = vpop.permute.xlu0 %752
        %756 = vset.pattern.permute.xlu0 0
        %757 = vperm.xlu0 %756, %v667
        %v758 = vpop.permute.xlu0 %757
        %761 = vset.pattern.permute.xlu0 0
        %762 = vperm.xlu0 %761, %v668
        %v763 = vpop.permute.xlu0 %762
        %766 = vset.pattern.permute.xlu0 0
        %767 = vperm.xlu0 %766, %v669
        %v768 = vpop.permute.xlu0 %767
        %771 = vset.pattern.permute.xlu0 0
        %772 = vperm.xlu0 %771, %v670
        %v773 = vpop.permute.xlu0 %772
        %776 = vset.pattern.permute.xlu0 0
        %777 = vperm.xlu0 %776, %v671
        %v778 = vpop.permute.xlu0 %777
        %781 = vset.pattern.permute.xlu0 0
        %782 = vperm.xlu0 %781, %v672
        %v783 = vpop.permute.xlu0 %782
        %786 = vset.pattern.permute.xlu0 0
        %787 = vperm.xlu0 %786, %v673
        %v788 = vpop.permute.xlu0 %787
        %791 = vset.pattern.permute.xlu0 0
        %792 = vperm.xlu0 %791, %v674
        %v793 = vpop.permute.xlu0 %792
        %796 = vset.pattern.permute.xlu0 0
        %797 = vperm.xlu0 %796, %v675
        %v798 = vpop.permute.xlu0 %797
        %801 = vset.pattern.permute.xlu0 0
        %802 = vperm.xlu0 %801, %v676
        %v803 = vpop.permute.xlu0 %802
        %806 = vset.pattern.permute.xlu0 0
        %807 = vperm.xlu0 %806, %v677
        %v808 = vpop.permute.xlu0 %807
        %811 = vset.pattern.permute.xlu0 0
        %812 = vperm.xlu0 %811, %v678
        %v813 = vpop.permute.xlu0 %812
        %816 = vset.pattern.permute.xlu0 0
        %817 = vperm.xlu0 %816, %v679
        %v818 = vpop.permute.xlu0 %817
        %821 = vset.pattern.permute.xlu0 0
        %822 = vperm.xlu0 %821, %v680
        %v823 = vpop.permute.xlu0 %822
        %826 = vset.pattern.permute.xlu0 0
        %827 = vperm.xlu0 %826, %v681
        %v828 = vpop.permute.xlu0 %827
        %831 = vset.pattern.permute.xlu0 0
        %832 = vperm.xlu0 %831, %v682
        %v833 = vpop.permute.xlu0 %832
        %836 = vset.pattern.permute.xlu0 0
        %837 = vperm.xlu0 %836, %v683
        %v838 = vpop.permute.xlu0 %837
        %841 = vset.pattern.permute.xlu0 0
        %842 = vperm.xlu0 %841, %v684
        %v843 = vpop.permute.xlu0 %842
        %846 = vset.pattern.permute.xlu0 0
        %847 = vperm.xlu0 %846, %v685
        %v848 = vpop.permute.xlu0 %847
        %851 = vset.pattern.permute.xlu0 0
        %852 = vperm.xlu0 %851, %v686
        %v853 = vpop.permute.xlu0 %852
        %856 = vset.pattern.permute.xlu0 0
        %857 = vperm.xlu0 %856, %v687
        %v858 = vpop.permute.xlu0 %857
        %861 = vset.pattern.permute.xlu0 0
        %862 = vperm.xlu0 %861, %v688
        %v863 = vpop.permute.xlu0 %862
        %866 = vset.pattern.permute.xlu0 0
        %867 = vperm.xlu0 %866, %v689
        %v868 = vpop.permute.xlu0 %867
        %871 = vset.pattern.permute.xlu0 0
        %872 = vperm.xlu0 %871, %v690
        %v873 = vpop.permute.xlu0 %872
        %876 = vset.pattern.permute.xlu0 0
        %877 = vperm.xlu0 %876, %v691
        %v878 = vpop.permute.xlu0 %877
        %881 = vset.pattern.permute.xlu0 0
        %882 = vperm.xlu0 %881, %v692
        %v883 = vpop.permute.xlu0 %882
        %886 = vset.pattern.permute.xlu0 0
        %887 = vperm.xlu0 %886, %v693
        %v888 = vpop.permute.xlu0 %887
        %891 = vset.pattern.permute.xlu0 0
        %892 = vperm.xlu0 %891, %v694
        %v893 = vpop.permute.xlu0 %892
        %896 = vset.pattern.permute.xlu0 0
        %897 = vperm.xlu0 %896, %v695
        %v898 = vpop.permute.xlu0 %897
        %901 = vset.pattern.permute.xlu0 0
        %902 = vperm.xlu0 %901, %v696
        %v903 = vpop.permute.xlu0 %902
        %906 = vset.pattern.permute.xlu0 0
        %907 = vperm.xlu0 %906, %v697
        %v908 = vpop.permute.xlu0 %907
        %911 = vset.pattern.permute.xlu0 0
        %912 = vperm.xlu0 %911, %v698
        %v913 = vpop.permute.xlu0 %912
        %916 = vset.pattern.permute.xlu0 0
        %917 = vperm.xlu0 %916, %v699
        %v918 = vpop.permute.xlu0 %917
        %921 = vset.pattern.permute.xlu0 0
        %922 = vperm.xlu0 %921, %v700
        %v923 = vpop.permute.xlu0 %922
        %926 = vset.pattern.permute.xlu0 0
        %927 = vperm.xlu0 %926, %v701
        %v928 = vpop.permute.xlu0 %927
        %931 = vset.pattern.permute.xlu0 0
        %932 = vperm.xlu0 %931, %v702
        %v933 = vpop.permute.xlu0 %932
        %936 = vset.pattern.permute.xlu0 0
        %937 = vperm.xlu0 %936, %v703
        %v938 = vpop.permute.xlu0 %937
        %941 = vset.pattern.permute.xlu0 0
        %942 = vperm.xlu0 %941, %v704
        %v943 = vpop.permute.xlu0 %942
        %946 = vset.pattern.permute.xlu0 0
        %947 = vperm.xlu0 %946, %v705
        %v948 = vpop.permute.xlu0 %947
        %951 = vset.pattern.permute.xlu0 0
        %952 = vperm.xlu0 %951, %v706
        %v953 = vpop.permute.xlu0 %952
        %956 = vset.pattern.permute.xlu0 0
        %957 = vperm.xlu0 %956, %v707
        %v958 = vpop.permute.xlu0 %957
        %961 = vset.pattern.permute.xlu0 0
        %962 = vperm.xlu0 %961, %v708
        %v963 = vpop.permute.xlu0 %962
        %966 = vset.pattern.permute.xlu0 0
        %967 = vperm.xlu0 %966, %v709
        %v968 = vpop.permute.xlu0 %967
        %971 = vset.pattern.permute.xlu0 0
        %972 = vperm.xlu0 %971, %v710
        %v973 = vpop.permute.xlu0 %972
        %976 = vset.pattern.permute.xlu0 0
        %977 = vperm.xlu0 %976, %v711
        %v978 = vpop.permute.xlu0 %977
        %981 = vset.pattern.permute.xlu0 0
        %982 = vperm.xlu0 %981, %v712
        %v983 = vpop.permute.xlu0 %982
        %986 = vset.pattern.permute.xlu0 0
        %987 = vperm.xlu0 %986, %v713
        %v988 = vpop.permute.xlu0 %987
        %991 = vset.pattern.permute.xlu0 0
        %992 = vperm.xlu0 %991, %v714
        %v993 = vpop.permute.xlu0 %992
        %996 = vset.pattern.permute.xlu0 0
        %997 = vperm.xlu0 %996, %v715
        %v998 = vpop.permute.xlu0 %997
        %1001 = vset.pattern.permute.xlu0 0
        %1002 = vperm.xlu0 %1001, %v716
        %v1003 = vpop.permute.xlu0 %1002
        %1006 = vset.pattern.permute.xlu0 0
        %1007 = vperm.xlu0 %1006, %v717
        %v1008 = vpop.permute.xlu0 %1007
        %1011 = vset.pattern.permute.xlu0 0
        %1012 = vperm.xlu0 %1011, %v718
        %v1013 = vpop.permute.xlu0 %1012
        %1016 = vset.pattern.permute.xlu0 0
        %1017 = vperm.xlu0 %1016, %v719
        %v1018 = vpop.permute.xlu0 %1017
        %1021 = vset.pattern.permute.xlu0 0
        %1022 = vperm.xlu0 %1021, %v720
        %v1023 = vpop.permute.xlu0 %1022
        %1026 = vset.pattern.permute.xlu0 0
        %1027 = vperm.xlu0 %1026, %v721
        %v1028 = vpop.permute.xlu0 %1027
        %1031 = vset.pattern.permute.xlu0 0
        %1032 = vperm.xlu0 %1031, %v722
        %v1033 = vpop.permute.xlu0 %1032
        %1036 = vset.pattern.permute.xlu0 0
        %1037 = vperm.xlu0 %1036, %v723
        %v1038 = vpop.permute.xlu0 %1037
        %1041 = vset.pattern.permute.xlu0 0
        %1042 = vperm.xlu0 %1041, %v724
        %v1043 = vpop.permute.xlu0 %1042
        %v1045 = vsel %vm533, %v728, 0.0
        %v1046 = vsel %vm534, %v728, 0.0
        %v1047 = vsel %vm535, %v733, 0.0
        %v1048 = vsel %vm536, %v733, 0.0
        %v1049 = vsel %vm537, %v738, 0.0
        %v1050 = vsel %vm538, %v738, 0.0
        %v1051 = vsel %vm539, %v743, 0.0
        %v1052 = vsel %vm540, %v743, 0.0
        %v1053 = vsel %vm541, %v748, 0.0
        %v1054 = vsel %vm542, %v748, 0.0
        %v1055 = vsel %vm543, %v753, 0.0
        %v1056 = vsel %vm544, %v753, 0.0
        %v1057 = vsel %vm545, %v758, 0.0
        %v1058 = vsel %vm546, %v758, 0.0
        %v1059 = vsel %vm547, %v763, 0.0
        %v1060 = vsel %vm548, %v763, 0.0
        %v1061 = vsel %vm549, %v768, 0.0
        %v1062 = vsel %vm550, %v768, 0.0
        %v1063 = vsel %vm551, %v773, 0.0
        %v1064 = vsel %vm552, %v773, 0.0
        %v1065 = vsel %vm553, %v778, 0.0
        %v1066 = vsel %vm554, %v778, 0.0
        %v1067 = vsel %vm555, %v783, 0.0
        %v1068 = vsel %vm556, %v783, 0.0
        %v1069 = vsel %vm557, %v788, 0.0
        %v1070 = vsel %vm558, %v788, 0.0
        %v1071 = vsel %vm559, %v793, 0.0
        %v1072 = vsel %vm560, %v793, 0.0
        %v1073 = vsel %vm561, %v798, 0.0
        %v1074 = vsel %vm562, %v798, 0.0
        %v1075 = vsel %vm563, %v803, 0.0
        %v1076 = vsel %vm564, %v803, 0.0
        %v1077 = vsel %vm565, %v808, 0.0
        %v1078 = vsel %vm566, %v808, 0.0
        %v1079 = vsel %vm567, %v813, 0.0
        %v1080 = vsel %vm568, %v813, 0.0
        %v1081 = vsel %vm569, %v818, 0.0
        %v1082 = vsel %vm570, %v818, 0.0
        %v1083 = vsel %vm571, %v823, 0.0
        %v1084 = vsel %vm572, %v823, 0.0
        %v1085 = vsel %vm573, %v828, 0.0
        %v1086 = vsel %vm574, %v828, 0.0
        %v1087 = vsel %vm575, %v833, 0.0
        %v1088 = vsel %vm576, %v833, 0.0
        %v1089 = vsel %vm577, %v838, 0.0
        %v1090 = vsel %vm578, %v838, 0.0
        %v1091 = vsel %vm579, %v843, 0.0
        %v1092 = vsel %vm580, %v843, 0.0
        %v1093 = vsel %vm581, %v848, 0.0
        %v1094 = vsel %vm582, %v848, 0.0
        %v1095 = vsel %vm583, %v853, 0.0
        %v1096 = vsel %vm584, %v853, 0.0
        %v1097 = vsel %vm585, %v858, 0.0
        %v1098 = vsel %vm586, %v858, 0.0
        %v1099 = vsel %vm587, %v863, 0.0
        %v1100 = vsel %vm588, %v863, 0.0
        %v1101 = vsel %vm589, %v868, 0.0
        %v1102 = vsel %vm590, %v868, 0.0
        %v1103 = vsel %vm591, %v873, 0.0
        %v1104 = vsel %vm592, %v873, 0.0
        %v1105 = vsel %vm593, %v878, 0.0
        %v1106 = vsel %vm594, %v878, 0.0
        %v1107 = vsel %vm595, %v883, 0.0
        %v1108 = vsel %vm596, %v883, 0.0
        %v1109 = vsel %vm597, %v888, 0.0
        %v1110 = vsel %vm598, %v888, 0.0
        %v1111 = vsel %vm599, %v893, 0.0
        %v1112 = vsel %vm600, %v893, 0.0
        %v1113 = vsel %vm601, %v898, 0.0
        %v1114 = vsel %vm602, %v898, 0.0
        %v1115 = vsel %vm603, %v903, 0.0
        %v1116 = vsel %vm604, %v903, 0.0
        %v1117 = vsel %vm605, %v908, 0.0
        %v1118 = vsel %vm606, %v908, 0.0
        %v1119 = vsel %vm607, %v913, 0.0
        %v1120 = vsel %vm608, %v913, 0.0
        %v1121 = vsel %vm609, %v918, 0.0
        %v1122 = vsel %vm610, %v918, 0.0
        %v1123 = vsel %vm611, %v923, 0.0
        %v1124 = vsel %vm612, %v923, 0.0
        %v1125 = vsel %vm613, %v928, 0.0
        %v1126 = vsel %vm614, %v928, 0.0
        %v1127 = vsel %vm615, %v933, 0.0
        %v1128 = vsel %vm616, %v933, 0.0
        %v1129 = vsel %vm617, %v938, 0.0
        %v1130 = vsel %vm618, %v938, 0.0
        %v1131 = vsel %vm619, %v943, 0.0
        %v1132 = vsel %vm620, %v943, 0.0
        %v1133 = vsel %vm621, %v948, 0.0
        %v1134 = vsel %vm622, %v948, 0.0
        %v1135 = vsel %vm623, %v953, 0.0
        %v1136 = vsel %vm624, %v953, 0.0
        %v1137 = vsel %vm625, %v958, 0.0
        %v1138 = vsel %vm626, %v958, 0.0
        %v1139 = vsel %vm627, %v963, 0.0
        %v1140 = vsel %vm628, %v963, 0.0
        %v1141 = vsel %vm629, %v968, 0.0
        %v1142 = vsel %vm630, %v968, 0.0
        %v1143 = vsel %vm631, %v973, 0.0
        %v1144 = vsel %vm632, %v973, 0.0
        %v1145 = vsel %vm633, %v978, 0.0
        %v1146 = vsel %vm634, %v978, 0.0
        %v1147 = vsel %vm635, %v983, 0.0
        %v1148 = vsel %vm636, %v983, 0.0
        %v1149 = vsel %vm637, %v988, 0.0
        %v1150 = vsel %vm638, %v988, 0.0
        %v1151 = vsel %vm639, %v993, 0.0
        %v1152 = vsel %vm640, %v993, 0.0
        %v1153 = vsel %vm641, %v998, 0.0
        %v1154 = vsel %vm642, %v998, 0.0
        %v1155 = vsel %vm643, %v1003, 0.0
        %v1156 = vsel %vm644, %v1003, 0.0
        %v1157 = vsel %vm645, %v1008, 0.0
        %v1158 = vsel %vm646, %v1008, 0.0
        %v1159 = vsel %vm647, %v1013, 0.0
        %v1160 = vsel %vm648, %v1013, 0.0
        %v1161 = vsel %vm649, %v1018, 0.0
        %v1162 = vsel %vm650, %v1018, 0.0
        %v1163 = vsel %vm651, %v1023, 0.0
        %v1164 = vsel %vm652, %v1023, 0.0
        %v1165 = vsel %vm653, %v1028, 0.0
        %v1166 = vsel %vm654, %v1028, 0.0
        %v1167 = vsel %vm655, %v1033, 0.0
        %v1168 = vsel %vm656, %v1033, 0.0
        %v1169 = vsel %vm657, %v1038, 0.0
        %v1170 = vsel %vm658, %v1038, 0.0
        %v1171 = vsel %vm659, %v1043, 0.0
        %v1172 = vsel %vm660, %v1043, 0.0
        %v1173 = vld [vmem:[%s248] sm:$0x3]
        %v1174 = vadd.f32 %v1045, %v1047
        %v1175 = vadd.f32 %v1174, %v1049
        %v1176 = vadd.f32 %v1175, %v1051
        %v1177 = vadd.f32 %v1176, %v1053
        %v1178 = vadd.f32 %v1177, %v1055
        %v1179 = vadd.f32 %v1178, %v1057
        %v1180 = vadd.f32 %v1179, %v1059
        %v1181 = vadd.f32 %v1180, %v1061
        %v1182 = vadd.f32 %v1181, %v1063
        %v1183 = vadd.f32 %v1182, %v1065
        %v1184 = vadd.f32 %v1183, %v1067
        %v1185 = vadd.f32 %v1184, %v1069
        %v1186 = vadd.f32 %v1185, %v1071
        %v1187 = vadd.f32 %v1186, %v1073
        %v1188 = vadd.f32 %v1187, %v1075
        %v1189 = vadd.f32 %v1188, %v1077
        %v1190 = vadd.f32 %v1189, %v1079
        %v1191 = vadd.f32 %v1190, %v1081
        %v1192 = vadd.f32 %v1191, %v1083
        %v1193 = vadd.f32 %v1192, %v1085
        %v1194 = vadd.f32 %v1193, %v1087
        %v1195 = vadd.f32 %v1194, %v1089
        %v1196 = vadd.f32 %v1195, %v1091
        %v1197 = vadd.f32 %v1196, %v1093
        %v1198 = vadd.f32 %v1197, %v1095
        %v1199 = vadd.f32 %v1198, %v1097
        %v1200 = vadd.f32 %v1199, %v1099
        %v1201 = vadd.f32 %v1200, %v1101
        %v1202 = vadd.f32 %v1201, %v1103
        %v1203 = vadd.f32 %v1202, %v1105
        %v1204 = vadd.f32 %v1203, %v1107
        %v1205 = vadd.f32 %v1204, %v1109
        %v1206 = vadd.f32 %v1205, %v1111
        %v1207 = vadd.f32 %v1206, %v1113
        %v1208 = vadd.f32 %v1207, %v1115
        %v1209 = vadd.f32 %v1208, %v1117
        %v1210 = vadd.f32 %v1209, %v1119
        %v1211 = vadd.f32 %v1210, %v1121
        %v1212 = vadd.f32 %v1211, %v1123
        %v1213 = vadd.f32 %v1212, %v1125
        %v1214 = vadd.f32 %v1213, %v1127
        %v1215 = vadd.f32 %v1214, %v1129
        %v1216 = vadd.f32 %v1215, %v1131
        %v1217 = vadd.f32 %v1216, %v1133
        %v1218 = vadd.f32 %v1217, %v1135
        %v1219 = vadd.f32 %v1218, %v1137
        %v1220 = vadd.f32 %v1219, %v1139
        %v1221 = vadd.f32 %v1220, %v1141
        %v1222 = vadd.f32 %v1221, %v1143
        %v1223 = vadd.f32 %v1222, %v1145
        %v1224 = vadd.f32 %v1223, %v1147
        %v1225 = vadd.f32 %v1224, %v1149
        %v1226 = vadd.f32 %v1225, %v1151
        %v1227 = vadd.f32 %v1226, %v1153
        %v1228 = vadd.f32 %v1227, %v1155
        %v1229 = vadd.f32 %v1228, %v1157
        %v1230 = vadd.f32 %v1229, %v1159
        %v1231 = vadd.f32 %v1230, %v1161
        %v1232 = vadd.f32 %v1231, %v1163
        %v1233 = vadd.f32 %v1232, %v1165
        %v1234 = vadd.f32 %v1233, %v1167
        %v1235 = vadd.f32 %v1234, %v1169
        %v1236 = vadd.f32 %v1235, %v1171
        %v1237 = vrot.slane %v1236, 4
        %v1238 = vadd.f32 %v1236, %v1237
        %v1239 = vrot.slane %v1238, 2
        %v1240 = vadd.f32 %v1238, %v1239
        %v1241 = vrot.slane %v1240, 1
        %v1242 = vadd.f32 %v1240, %v1241
        %v1243 = vadd.f32 %v1046, %v1048
        %v1244 = vadd.f32 %v1243, %v1050
        %v1245 = vadd.f32 %v1244, %v1052
        %v1246 = vadd.f32 %v1245, %v1054
        %v1247 = vadd.f32 %v1246, %v1056
        %v1248 = vadd.f32 %v1247, %v1058
        %v1249 = vadd.f32 %v1248, %v1060
        %v1250 = vadd.f32 %v1249, %v1062
        %v1251 = vadd.f32 %v1250, %v1064
        %v1252 = vadd.f32 %v1251, %v1066
        %v1253 = vadd.f32 %v1252, %v1068
        %v1254 = vadd.f32 %v1253, %v1070
        %v1255 = vadd.f32 %v1254, %v1072
        %v1256 = vadd.f32 %v1255, %v1074
        %v1257 = vadd.f32 %v1256, %v1076
        %v1258 = vadd.f32 %v1257, %v1078
        %v1259 = vadd.f32 %v1258, %v1080
        %v1260 = vadd.f32 %v1259, %v1082
        %v1261 = vadd.f32 %v1260, %v1084
        %v1262 = vadd.f32 %v1261, %v1086
        %v1263 = vadd.f32 %v1262, %v1088
        %v1264 = vadd.f32 %v1263, %v1090
        %v1265 = vadd.f32 %v1264, %v1092
        %v1266 = vadd.f32 %v1265, %v1094
        %v1267 = vadd.f32 %v1266, %v1096
        %v1268 = vadd.f32 %v1267, %v1098
        %v1269 = vadd.f32 %v1268, %v1100
        %v1270 = vadd.f32 %v1269, %v1102
        %v1271 = vadd.f32 %v1270, %v1104
        %v1272 = vadd.f32 %v1271, %v1106
        %v1273 = vadd.f32 %v1272, %v1108
        %v1274 = vadd.f32 %v1273, %v1110
        %v1275 = vadd.f32 %v1274, %v1112
        %v1276 = vadd.f32 %v1275, %v1114
        %v1277 = vadd.f32 %v1276, %v1116
        %v1278 = vadd.f32 %v1277, %v1118
        %v1279 = vadd.f32 %v1278, %v1120
        %v1280 = vadd.f32 %v1279, %v1122
        %v1281 = vadd.f32 %v1280, %v1124
        %v1282 = vadd.f32 %v1281, %v1126
        %v1283 = vadd.f32 %v1282, %v1128
        %v1284 = vadd.f32 %v1283, %v1130
        %v1285 = vadd.f32 %v1284, %v1132
        %v1286 = vadd.f32 %v1285, %v1134
        %v1287 = vadd.f32 %v1286, %v1136
        %v1288 = vadd.f32 %v1287, %v1138
        %v1289 = vadd.f32 %v1288, %v1140
        %v1290 = vadd.f32 %v1289, %v1142
        %v1291 = vadd.f32 %v1290, %v1144
        %v1292 = vadd.f32 %v1291, %v1146
        %v1293 = vadd.f32 %v1292, %v1148
        %v1294 = vadd.f32 %v1293, %v1150
        %v1295 = vadd.f32 %v1294, %v1152
        %v1296 = vadd.f32 %v1295, %v1154
        %v1297 = vadd.f32 %v1296, %v1156
        %v1298 = vadd.f32 %v1297, %v1158
        %v1299 = vadd.f32 %v1298, %v1160
        %v1300 = vadd.f32 %v1299, %v1162
        %v1301 = vadd.f32 %v1300, %v1164
        %v1302 = vadd.f32 %v1301, %v1166
        %v1303 = vadd.f32 %v1302, %v1168
        %v1304 = vadd.f32 %v1303, %v1170
        %v1305 = vadd.f32 %v1304, %v1172
        %v1306 = vrot.slane %v1305, 4
        %v1307 = vadd.f32 %v1305, %v1306
        %v1308 = vrot.slane %v1307, 2
        %v1309 = vadd.f32 %v1307, %v1308
        %v1310 = vrot.slane %v1309, 1
        %v1311 = vadd.f32 %v1309, %v1310
        %v1314 = vcombine.low %v1242, %v1311
        %v1316 = vunpack.c.l.s4 1966171168
        %v1317 = vunpack.c.0.s8 %v1316
        %v1318 = vlaneseq
        %v1319 = vshrl.u32 %v1318, 7
        %v1320 = vsub.s32 %v1317, %v1319
        %v1321 = vrot.slane %v1314, %v1320
        %v1323 = vunpack.c.l.s4 1966171168
        %v1324 = vunpack.c.0.s8 %v1323
        %v1325 = vlaneseq
        %v1326 = vshrl.u32 %v1325, 7
        %v1327 = vsub.s32 %v1324, %v1326
        %v1328 = vrot.slane %v1321, %v1327
        %v1330 = vadd.f32 %v1173, %v1328
        %v1331 = vlaneseq
        %vm1332 = vcmp.ge.s32.totalorder %v1331, 0
        %vm1333 = vcmp.lt.s32.totalorder %v1331, 256
        %vm1334 = vmand %vm1332, %vm1333
        %1335 = vst.msk [vmem:[%s248] sm:$0x3] %vm1334, %v1330
      $region36: #{fwd.1} parent=27 // pred_fallthru
        _
      %s1336 = smul.u32 %s34, 11
      %s1337 = sadd.s32 %s1336, %s35
      %s1338 = sld [smem:[#allocation3 + %s1337]]
      %s1339 = smul.u32 2, %s1338
      %p1340 = scmp.lt.s32.totalorder %s1339, 19
      %s1341 = scalar_select %p1340, %s1339, 19
      %s1342 = scalar_lea.vmem %s5, %s1341
      // Predicated region
      $region37: #{fwd.1} parent=27 // pred_check
        %p1343 = pneg %p130
      $region38: #{fwd.1} parent=27 // pred_check_branch
        %1345 = sbr.rel (%p1343) target = $region40
      $region39: #{fwd.1} parent=27 // pred_region
        %s1346 = smul.u32 %s34, 11
        %s1347 = sadd.s32 %s1346, %s35
        %s1348 = sld [smem:[#allocation3 + %s1347]]
        %s1349 = smul.u32 2, %s1348
      $region40: #{fwd.1} parent=27 // pred_fallthru
        _
    $region28: #{fwd.1} parent=5 // pred_fallthru
      _
    %p1350 = scmp.le.s32.totalorder 2, %s25
    // Predicated region
    $region41: #{fwd.1} parent=5 // pred_check
      %p1351 = pneg %p1350
    $region42: #{fwd.1} parent=5 // pred_check_branch
      %1353 = sbr.rel (%p1351) target = $region44
    $region43: #{fwd.1} parent=5 // pred_region
      %s1354 = ssub.s32 %s25, 2
      // Predicated region
      $region45: #{fwd.1} parent=43 // pred_check
        %p1355 = pneg %p136
      $region46: #{fwd.1} parent=43 // pred_check_branch
        %1357 = sbr.rel (%p1355) target = $region48
      $region47: #{fwd.1} parent=43 // pred_region
        %s1358 = smul.u32 %s36, 11
        %s1359 = sadd.s32 %s1358, %s37
        %s1360 = sld [smem:[#allocation3 + %s1359]]
        %s1361 = smul.u32 2, %s1360
        %p1362 = scmp.lt.s32.totalorder %s1361, 19
        %s1363 = scalar_select %p1362, %s1361, 19
        %s1364 = scalar_lea.vmem %s5, %s1363
      $region48: #{fwd.1} parent=43 // pred_fallthru
        _
    $region44: #{fwd.1} parent=5 // pred_fallthru
      _
  $region6: #{fwd.1} parent=0 // loop_footer
    %s29 = sadd.s32 1, %s25
  $region7: #{fwd.1} parent=0 // loop_footer_branch
    %24 = sbr.rel target = $region3
  $region8: #{fwd.1} parent=0 // loop_exit
    _

</llo_original>
